<compile_context>
chip_gen: v6e
topology: v6e:2x2x1
jax: 0.10.0
libtpu: 0.0.40
codegen_flags: <defaults>
</compile_context>

<pallas_src>
import functools

import jax
import jax.numpy as jnp
import numpy as np
from jax import lax
from jax.experimental import pallas as pl
from jax.experimental.pallas import tpu as pltpu


# ---------------------------------------------------------------------------
# Kernels
# ---------------------------------------------------------------------------

def _ls_ce_kernel_3d(logit_ref, target_ref, wmask_ref, *out_refs,
                     label_smoothing, ignore_indices, logit_mask_sum,
                     emit_tmask):
    """One (bn, C, tt) tile of native [N, C, T] logits (time on lanes).

    logit_ref : (bn, C, tt)  any float dtype (upcast fused per pass)
    target_ref: (bn, tt)     int32
    wmask_ref : (C, 1)       f32  (class weight * logit_mask on sublanes)
    out_refs  : loss (bn, tt) f32  [+ tmask (bn, tt) f32 if emit_tmask]
    """
    loss_ref = out_refs[0]
    bn, C, tt = logit_ref.shape
    wmask = wmask_ref[...]                                     # (C, 1) f32

    # Pass 1: max over classes in the native dtype (convert fuses into the
    # reduce; never materializes an f32 copy of the whole tile).
    m = jnp.max(logit_ref[...], axis=1, keepdims=True).astype(jnp.float32)
    # Pass 2: sum of exp (per-vreg upcast fused into the expression).
    sum_exp = jnp.sum(jnp.exp(logit_ref[...].astype(jnp.float32) - m),
                      axis=1, keepdims=True)
    m_lse = m + jnp.log(sum_exp)                               # (bn, 1, tt)

    target = target_ref[...]                                   # (bn, tt) i32
    # Small broadcasted iota -> no (bn, C, tt) int32 temporary.
    cls = lax.broadcasted_iota(jnp.int32, (1, C, 1), 1)
    sel = cls == target[:, None, :]                            # (bn, C, tt)

    # Fused per-element coefficient: (1-ls)*onehot + ls/|logit_mask|.
    w_sel = (1.0 - label_smoothing) + label_smoothing / logit_mask_sum
    w_ls = label_smoothing / logit_mask_sum
    coef = jnp.where(sel, w_sel, w_ls)

    # Pass 3: one fused C-reduction; `q` is never materialized.
    loss_raw = jnp.sum(
        (m_lse - logit_ref[...].astype(jnp.float32)) * wmask * coef, axis=1)

    tmask = jnp.ones((bn, tt), jnp.float32)
    if ignore_indices:
        for idx in ignore_indices:
            tmask = tmask * (target != idx).astype(jnp.float32)

    # For ignored (in-range) targets wmask[target] == 0, so the nll part of
    # loss_raw is already 0 and multiplying the fused sum by tmask matches
    # the reference ((1-ls)*nll + ls*smooth*tmask).
    loss_ref[...] = loss_raw * tmask
    if emit_tmask:
        out_refs[1][...] = tmask


def _ls_ce_kernel_2d(logit_ref, target_ref, wmask_ref, *out_refs,
                     label_smoothing, ignore_indices, logit_mask_sum,
                     emit_tmask):
    """Lane-dense classification path: one (bn, C) tile, classes on lanes.

    logit_ref : (bn, C)   any float dtype
    target_ref: (bn, 1)   int32
    wmask_ref : (1, C)    f32 (lane-major)
    out_refs  : loss (bn, 1) f32  [+ tmask (bn, 1) f32 if emit_tmask]
    """
    loss_ref = out_refs[0]
    bn, C = logit_ref.shape
    wmask = wmask_ref[...]                                     # (1, C)

    m = jnp.max(logit_ref[...], axis=1, keepdims=True).astype(jnp.float32)
    sum_exp = jnp.sum(jnp.exp(logit_ref[...].astype(jnp.float32) - m),
                      axis=1, keepdims=True)
    m_lse = m + jnp.log(sum_exp)                               # (bn, 1)

    target = target_ref[...]                                   # (bn, 1) i32
    cls = lax.broadcasted_iota(jnp.int32, (1, C), 1)
    sel = cls == target                                        # (bn, C)

    w_sel = (1.0 - label_smoothing) + label_smoothing / logit_mask_sum
    w_ls = label_smoothing / logit_mask_sum
    coef = jnp.where(sel, w_sel, w_ls)

    loss_raw = jnp.sum(
        (m_lse - logit_ref[...].astype(jnp.float32)) * wmask * coef,
        axis=1, keepdims=True)                                 # (bn, 1)

    tmask = jnp.ones((bn, 1), jnp.float32)
    if ignore_indices:
        for idx in ignore_indices:
            tmask = tmask * (target != idx).astype(jnp.float32)

    loss_ref[...] = loss_raw * tmask
    if emit_tmask:
        out_refs[1][...] = tmask


# ---------------------------------------------------------------------------
# VMEM budgeting / tile picking
# ---------------------------------------------------------------------------

def _vmem_budget_bytes():
    """Generation-aware VMEM budget with ~25% headroom for Mosaic scratch.

    v7x (64 MiB physical) -> ~48 MiB; v5e/v6e (128 MiB) -> 96 MiB.
    """
    cap = 128 << 20
    try:
        info = pltpu.get_tpu_info()
        cap = int(getattr(info, "vmem_capacity_bytes", cap) or cap)
    except Exception:
        cap = 64 << 20      # conservative (v7x-sized) fallback
    return min((cap * 3) // 4, 96 << 20)


def _pick_tiles_3d(N, T, C, itemsize, n_small_out, budget_bytes):
    """Pick (bn, tt) so the REAL working set fits the VMEM budget.

    Working set per grid step (double-buffered pipeline):
      2 * bn*C*tt*itemsize            double-buffered logit tile
      + bn*C*tt*4                     fused f32 intermediate headroom
      + 2 * (1 + n_small_out)*bn*tt*4 target + outputs, double-buffered
      + 2 * C*128*4                   wmask block (lane-padded)
    Constraints: bn | N and (bn % 8 == 0 or bn == N);
                 tt | T and (tt % 128 == 0 or tt == T).
    """
    if T % 128 == 0:
        tt_opts = sorted({t for t in (T, 4096, 2048, 1024, 512, 256, 128)
                          if T % t == 0}, reverse=True)
    else:
        tt_opts = [T]
    bn_opts = [b for b in range(N, 0, -1)
               if N % b == 0 and (b % 8 == 0 or b == N)]

    best = None
    for tt in tt_opts:
        for bn in bn_opts:
            ws = (bn * C * tt * (2 * itemsize + 4)
                  + 2 * (1 + n_small_out) * bn * tt * 4
                  + 2 * C * 128 * 4)
            if ws <= budget_bytes:
                if best is None or bn * tt > best[0] * best[1]:
                    best = (bn, tt)
    if best is None:
        # TODO(synk): C-tiled online-softmax path for very large vocabularies.
        raise ValueError(
            f"label_smoothing_cross_entropy: a full-C tile (C={C}) does not "
            f"fit the VMEM budget ({budget_bytes} bytes); a C-tiled "
            f"online-softmax path is required for this vocabulary size.")
    return best


def _pick_tiles_2d(N, C, itemsize, n_small_out, budget_bytes):
    bn_opts = [b for b in range(N, 0, -1)
               if N % b == 0 and (b % 8 == 0 or b == N)]
    for bn in bn_opts:          # descending: largest fitting tile wins
        ws = (bn * C * (2 * itemsize + 4)
              + 2 * (1 + n_small_out) * bn * 128 * 4
              + 2 * 8 * C * 4)
        if ws <= budget_bytes:
            return bn
    raise ValueError(
        f"label_smoothing_cross_entropy: a full-C row tile (C={C}) does not "
        f"fit the VMEM budget ({budget_bytes} bytes).")


# ---------------------------------------------------------------------------
# Wrapper
# ---------------------------------------------------------------------------

def label_smoothing_cross_entropy(logit, target, *, weight=None,
                                  ignore_indices=None, reduction="none",
                                  label_smoothing=0.0,
                                  block_n=None, block_t=None):
    """JAX/Pallas equivalent of LabelSmoothingCrossEntropyLoss.forward."""
    if isinstance(ignore_indices, int):
        ignore_indices = [ignore_indices]
    if ignore_indices is not None:
        ignore_indices = sorted({int(i) for i in ignore_indices})
        if not ignore_indices:
            ignore_indices = None
    assert reduction in ("none", "mean_batch_prior",
                         "mean_temporal_prior", "sum")
    assert 0.0 <= label_smoothing <= 1.0

    is_2d = (logit.ndim == 2)
    if is_2d:
        N, C = logit.shape
        T = 1
        target2 = jnp.reshape(target, (N, 1)).astype(jnp.int32)
    else:
        assert logit.ndim == 3, f"{logit.shape}"
        N, C, T = logit.shape
        assert target.shape == (N, T), f"{(logit.shape, target.shape)}"
        target2 = target.astype(jnp.int32)

    if ignore_indices is not None:
        for idx in ignore_indices:
            if not (0 <= idx < C):
                raise ValueError(
                    f"ignore index {idx} out of range [0, {C}); negative / "
                    f"out-of-range ignore indices are not supported.")
        logit_mask_sum = float(C - len(ignore_indices))
    else:
        logit_mask_sum = float(C)

    # class weights * logit_mask folded into one vector.
    w = (jnp.ones((C,), jnp.float32) if weight is None
         else jnp.asarray(weight, jnp.float32))
    if ignore_indices is not None:
        lm = jnp.ones((C,), jnp.float32).at[jnp.asarray(ignore_indices)].set(0.0)
        wvec = w * lm
    else:
        wvec = w

    # tmask is only needed (and only written back to HBM) for these two.
    emit_tmask = reduction in ("mean_batch_prior", "mean_temporal_prior")
    n_small_out = 2 if emit_tmask else 1
    budget = _vmem_budget_bytes()

    if is_2d:
        # --- lane-dense classification path: [N, C], classes on lanes ---
        bn = _pick_tiles_2d(N, C, logit.dtype.itemsize, n_small_out, budget)
        if block_n is not None:
            bn = block_n
        assert N % bn == 0

        kernel = functools.partial(
            _ls_ce_kernel_2d,
            label_smoothing=float(label_smoothing),
            ignore_indices=ignore_indices,
            logit_mask_sum=logit_mask_sum,
            emit_tmask=emit_tmask)

        out_shape = [jax.ShapeDtypeStruct((N, 1), jnp.float32)]
        out_specs = [pl.BlockSpec((bn, 1), lambda i: (i, 0))]
        if emit_tmask:
            out_shape.append(jax.ShapeDtypeStruct((N, 1), jnp.float32))
            out_specs.append(pl.BlockSpec((bn, 1), lambda i: (i, 0)))

        outs = pl.pallas_call(
            kernel,
            out_shape=out_shape,
            grid_spec=pltpu.PrefetchScalarGridSpec(
                num_scalar_prefetch=0,
                grid=(N // bn,),
                in_specs=[
                    pl.BlockSpec((bn, C), lambda i: (i, 0)),     # logits
                    pl.BlockSpec((bn, 1), lambda i: (i, 0)),     # target
                    pl.BlockSpec((1, C), lambda i: (0, 0)),      # wmask (lane-major)
                ],
                out_specs=out_specs,
            ),
            compiler_params=pltpu.CompilerParams(
                dimension_semantics=("parallel",),
                vmem_limit_bytes=budget),
        )(logit, target2, wvec[None, :])
    else:
        # --- native [N, C, T] path: classes on sublanes, time on lanes ---
        bn, tt = _pick_tiles_3d(N, T, C, logit.dtype.itemsize,
                                n_small_out, budget)
        if block_n is not None:
            bn = block_n
        if block_t is not None:
            tt = block_t
        assert N % bn == 0 and T % tt == 0

        kernel = functools.partial(
            _ls_ce_kernel_3d,
            label_smoothing=float(label_smoothing),
            ignore_indices=ignore_indices,
            logit_mask_sum=logit_mask_sum,
            emit_tmask=emit_tmask)

        out_shape = [jax.ShapeDtypeStruct((N, T), jnp.float32)]
        out_specs = [pl.BlockSpec((bn, tt), lambda i, j: (i, j))]
        if emit_tmask:
            out_shape.append(jax.ShapeDtypeStruct((N, T), jnp.float32))
            out_specs.append(pl.BlockSpec((bn, tt), lambda i, j: (i, j)))

        outs = pl.pallas_call(
            kernel,
            out_shape=out_shape,
            grid_spec=pltpu.PrefetchScalarGridSpec(
                num_scalar_prefetch=0,
                grid=(N // bn, T // tt),
                in_specs=[
                    # If v7x profiling shows exposed DMA with its smaller
                    # tiles, add pipeline_mode=pl.Buffered(3) here.
                    pl.BlockSpec((bn, C, tt), lambda i, j: (i, 0, j)),  # logits
                    pl.BlockSpec((bn, tt), lambda i, j: (i, j)),        # target
                    pl.BlockSpec((C, 1), lambda i, j: (0, 0)),          # wmask
                ],
                out_specs=out_specs,
            ),
            compiler_params=pltpu.CompilerParams(
                dimension_semantics=("parallel", "parallel"),
                vmem_limit_bytes=budget),
        )(logit, target2, wvec[:, None])

    loss_nt = outs[0]                                   # (N, T) or (N, 1)
    tmask_nt = outs[1] if emit_tmask else None

    # ---- reductions (tiny glue, matches the PyTorch control flow) ----
    if reduction == "mean_batch_prior":
        denom_t = jnp.maximum(jnp.sum(tmask_nt, axis=0), 1.0)        # (T,)
        loss = jnp.sum(loss_nt / denom_t[None, :], axis=-1)          # (N,)
        return jnp.sum(loss) / float(T)

    loss = jnp.sum(loss_nt, axis=-1)                                 # (N,)
    if reduction == "sum":
        return jnp.sum(loss)
    if reduction == "mean_temporal_prior":
        lengths = jnp.sum(tmask_nt, axis=-1)                         # (N,)
        return jnp.mean(loss / jnp.maximum(lengths, 1.0))
    return loss                                                      # 'none'


# ---------------------------------------------------------------------------
# Pure-JAX reference (correctness check only)
# ---------------------------------------------------------------------------

def _reference(logit, target, weight, ignore_indices, reduction,
               label_smoothing):
    """Pure-JAX replica of the PyTorch forward. logit: [N, C, T]."""
    N, C, T = logit.shape
    logit_ntc = jnp.transpose(logit, (0, 2, 1)).astype(jnp.float32)
    logit_mask = jnp.ones((C,), jnp.float32)
    if ignore_indices is not None:
        logit_mask = logit_mask.at[jnp.asarray(ignore_indices)].set(0.0)
    w = (jnp.ones((C,), jnp.float32) if weight is None
         else jnp.asarray(weight, jnp.float32))
    logprobs = jax.nn.log_softmax(logit_ntc, axis=-1)
    logprobs_m = logprobs * (w * logit_mask)[None, None, :]
    nll = -jnp.take_along_axis(logprobs_m, target[..., None], axis=-1)[..., 0]
    tmask = jnp.ones((N, T), jnp.float32)
    if ignore_indices is not None:
        for idx in ignore_indices:
            tmask = tmask * (target != idx).astype(jnp.float32)
    smooth = -jnp.sum(logprobs_m, axis=-1) / jnp.sum(logit_mask) * tmask
    loss_nt = (1.0 - label_smoothing) * nll + label_smoothing * smooth
    if reduction == "mean_batch_prior":
        denom_t = (jnp.maximum(jnp.sum(tmask, axis=0), 1.0)
                   if ignore_indices is not None
                   else jnp.full((T,), float(max(N, 1))))
        return jnp.sum(jnp.sum(loss_nt / denom_t[None, :], axis=-1)) / float(T)
    loss = jnp.sum(loss_nt, axis=-1)
    if reduction == "sum":
        return jnp.sum(loss)
    if reduction == "mean_temporal_prior":
        return jnp.mean(loss / jnp.maximum(jnp.sum(tmask, axis=-1), 1.0))
    return loss


if __name__ == "__main__":
    key = jax.random.PRNGKey(0)
    k1, k2, k3, k4, k5 = jax.random.split(key, 5)

    ignore_indices = [0]
    ls = 0.1
    reductions = ("mean_temporal_prior", "mean_batch_prior", "sum", "none")

    # ---- 3-D path: logit [N, C, T], target [N, T] (native PyTorch layout) ----
    N, C, T = 8, 32, 8
    logit3 = jax.random.normal(k1, (N, C, T), jnp.float32)
    target3 = jax.random.randint(k2, (N, T), 0, C).astype(jnp.int32)
    weight = 0.5 + jax.random.uniform(k3, (C,), jnp.float32)

    for reduction in reductions:
        out = label_smoothing_cross_entropy(
            logit3, target3, weight=weight, ignore_indices=ignore_indices,
            reduction=reduction, label_smoothing=ls)
        out = jax.block_until_ready(out)
        ref = _reference(logit3, target3, weight, ignore_indices, reduction, ls)
        np.testing.assert_allclose(np.asarray(out), np.asarray(ref),
                                   rtol=1e-5, atol=1e-5)

    # ---- 2-D path: logit [N, C], target [N] (lane-dense classification) ----
    N2, C2 = 16, 32
    logit2 = jax.random.normal(k4, (N2, C2), jnp.float32)
    target2 = jax.random.randint(k5, (N2,), 0, C2).astype(jnp.int32)

    for reduction in reductions:
        out = label_smoothing_cross_entropy(
            logit2, target2, weight=weight, ignore_indices=ignore_indices,
            reduction=reduction, label_smoothing=ls)
        out = jax.block_until_ready(out)
        ref = _reference(logit2[:, :, None], target2[:, None], weight,
                         ignore_indices, reduction, ls)
        np.testing.assert_allclose(np.asarray(out), np.asarray(ref),
                                   rtol=1e-5, atol=1e-5)

    print("KERNEL_OK")
</pallas_src>

<mosaic_0001>
module attributes {stable_mosaic.version = 11 : i64} {
  func.func @_ls_ce_kernel_3d(%arg0: i32, %arg1: i32, %arg2: memref<8x32x8xf32, #tpu.memory_space<vmem>>, %arg3: memref<8x8xi32, #tpu.memory_space<vmem>>, %arg4: memref<32x1xf32, #tpu.memory_space<vmem>>, %arg5: memref<8x8xf32, #tpu.memory_space<vmem>>, %arg6: memref<8x8xf32, #tpu.memory_space<vmem>>) attributes {dimension_semantics = [#tpu.dimension_semantics<parallel>, #tpu.dimension_semantics<parallel>], iteration_bounds = array<i64: 1, 1>, scalar_prefetch = 0 : i64, scratch_operands = 0 : i64, tpu.core_type = #tpu.core_type<tc>, window_params = [{transform_indices = @transform_0, window_bounds = array<i64: 8, 32, 8>}, {transform_indices = @transform_1, window_bounds = array<i64: 8, 8>}, {pipeline_mode = #tpu.pipeline_mode<synchronous>, transform_indices = @transform_2, window_bounds = array<i64: 32, 1>}, {transform_indices = @transform_3, window_bounds = array<i64: 8, 8>}, {transform_indices = @transform_4, window_bounds = array<i64: 8, 8>}]} {
    %c0 = arith.constant 0 : index
    %c0_0 = arith.constant 0 : index
    %0 = vector.load %arg4[%c0, %c0_0] : memref<32x1xf32, #tpu.memory_space<vmem>>, vector<32x1xf32>
    %c0_1 = arith.constant 0 : index
    %c0_2 = arith.constant 0 : index
    %c0_3 = arith.constant 0 : index
    %1 = vector.load %arg2[%c0_1, %c0_2, %c0_3] : memref<8x32x8xf32, #tpu.memory_space<vmem>>, vector<8x32x8xf32>
    %cst = arith.constant dense<0xFF800000> : vector<8x8xf32>
    %2 = vector.multi_reduction <maximumf>, %1, %cst [1] : vector<8x32x8xf32> to vector<8x8xf32>
    %3 = vector.shape_cast %2 : vector<8x8xf32> to vector<8x1x8xf32>
    %c0_4 = arith.constant 0 : index
    %c0_5 = arith.constant 0 : index
    %c0_6 = arith.constant 0 : index
    %4 = vector.load %arg2[%c0_4, %c0_5, %c0_6] : memref<8x32x8xf32, #tpu.memory_space<vmem>>, vector<8x32x8xf32>
    %5 = vector.broadcast %3 : vector<8x1x8xf32> to vector<8x32x8xf32>
    %6 = arith.subf %4, %5 : vector<8x32x8xf32>
    %7 = math.exp %6 : vector<8x32x8xf32>
    %cst_7 = arith.constant dense<0.000000e+00> : vector<8x8xf32>
    %8 = vector.multi_reduction <add>, %7, %cst_7 [1] : vector<8x32x8xf32> to vector<8x8xf32>
    %9 = vector.shape_cast %8 : vector<8x8xf32> to vector<8x1x8xf32>
    %10 = math.log %9 : vector<8x1x8xf32>
    %11 = arith.addf %3, %10 : vector<8x1x8xf32>
    %c0_8 = arith.constant 0 : index
    %c0_9 = arith.constant 0 : index
    %12 = vector.load %arg3[%c0_8, %c0_9] : memref<8x8xi32, #tpu.memory_space<vmem>>, vector<8x8xi32>
    %13 = tpu.iota {dimensions = array<i32: 1>} : vector<1x32x1xi32>
    %14 = vector.shape_cast %12 : vector<8x8xi32> to vector<8x1x8xi32>
    %15 = vector.broadcast %13 : vector<1x32x1xi32> to vector<8x32x8xi32>
    %16 = vector.broadcast %14 : vector<8x1x8xi32> to vector<8x32x8xi32>
    %17 = arith.cmpi eq, %15, %16 : vector<8x32x8xi32>
    %cst_10 = arith.constant 0.903225779 : f32
    %cst_11 = arith.constant 0.0032258064 : f32
    %18 = vector.broadcast %cst_10 : f32 to vector<8x32x8xf32>
    %19 = vector.broadcast %cst_11 : f32 to vector<8x32x8xf32>
    %20 = arith.select %17, %18, %19 : vector<8x32x8xi1>, vector<8x32x8xf32>
    %c0_12 = arith.constant 0 : index
    %c0_13 = arith.constant 0 : index
    %c0_14 = arith.constant 0 : index
    %21 = vector.load %arg2[%c0_12, %c0_13, %c0_14] : memref<8x32x8xf32, #tpu.memory_space<vmem>>, vector<8x32x8xf32>
    %22 = vector.broadcast %11 : vector<8x1x8xf32> to vector<8x32x8xf32>
    %23 = arith.subf %22, %21 : vector<8x32x8xf32>
    %24 = vector.shape_cast %0 : vector<32x1xf32> to vector<1x32x1xf32>
    %25 = vector.broadcast %24 : vector<1x32x1xf32> to vector<8x32x8xf32>
    %26 = arith.mulf %23, %25 : vector<8x32x8xf32>
    %27 = arith.mulf %26, %20 : vector<8x32x8xf32>
    %cst_15 = arith.constant dense<0.000000e+00> : vector<8x8xf32>
    %28 = vector.multi_reduction <add>, %27, %cst_15 [1] : vector<8x32x8xf32> to vector<8x8xf32>
    %cst_16 = arith.constant 1.000000e+00 : f32
    %29 = vector.broadcast %cst_16 : f32 to vector<8x8xf32>
    %c0_i32 = arith.constant 0 : i32
    %30 = vector.broadcast %c0_i32 : i32 to vector<8x8xi32>
    %31 = arith.cmpi ne, %12, %30 : vector<8x8xi32>
    %32 = arith.extui %31 : vector<8x8xi1> to vector<8x8xi32>
    %33 = arith.sitofp %32 : vector<8x8xi32> to vector<8x8xf32>
    %34 = arith.mulf %29, %33 : vector<8x8xf32>
    %35 = arith.mulf %28, %34 : vector<8x8xf32>
    %c0_17 = arith.constant 0 : index
    %c0_18 = arith.constant 0 : index
    %36 = vector.load %arg5[%c0_17, %c0_18] : memref<8x8xf32, #tpu.memory_space<vmem>>, vector<8x8xf32>
    tpu.vector_store %arg5[%c0_17, %c0_18], %35 {strides = array<i32>} : memref<8x8xf32, #tpu.memory_space<vmem>>, vector<8x8xf32>,
    %c0_19 = arith.constant 0 : index
    %c0_20 = arith.constant 0 : index
    %37 = vector.load %arg6[%c0_19, %c0_20] : memref<8x8xf32, #tpu.memory_space<vmem>>, vector<8x8xf32>
    tpu.vector_store %arg6[%c0_19, %c0_20], %34 {strides = array<i32>} : memref<8x8xf32, #tpu.memory_space<vmem>>, vector<8x8xf32>,
    return
  }
  func.func @transform_0(%arg0: i32, %arg1: i32) -> (i32, i32, i32) {
    %c0_i32 = arith.constant 0 : i32
    %c0_i32_0 = arith.constant 0 : i32
    return %arg0, %c0_i32, %arg1 : i32, i32, i32
  }
  func.func @transform_1(%arg0: i32, %arg1: i32) -> (i32, i32) {
    %c0_i32 = arith.constant 0 : i32
    return %arg0, %arg1 : i32, i32
  }
  func.func @transform_2(%arg0: i32, %arg1: i32) -> (i32, i32) {
    %c0_i32 = arith.constant 0 : i32
    %c0_i32_0 = arith.constant 0 : i32
    %c0_i32_1 = arith.constant 0 : i32
    return %c0_i32, %c0_i32_0 : i32, i32
  }
  func.func @transform_3(%arg0: i32, %arg1: i32) -> (i32, i32) {
    %c0_i32 = arith.constant 0 : i32
    return %arg0, %arg1 : i32, i32
  }
  func.func @transform_4(%arg0: i32, %arg1: i32) -> (i32, i32) {
    %c0_i32 = arith.constant 0 : i32
    return %arg0, %arg1 : i32, i32
  }
}

</mosaic_0001>

<llo_original>
// kernel: tpu_custom_call.1
$region0: #{tpu_custom_call.1}
  #allocation0 [shape = 'u32[]', space=smem, size = 0x4, offset = 0x4, fixed_abs, tag = 'smem constant byte address 0x4 - core index']
  #allocation1 [shape = 'u32[144,128]{1,0:T(1,128)}', space=vmem, size = 0x12000, scoped, tag = 'internal scratch']
  %s0 = inlined_call_operand.vmem [shape: f32[8,32,8], index: 0, kind: input, shape index: {}]
  %s1 = inlined_call_operand.vmem [shape: s32[8,8], index: 1, kind: input, shape index: {}]
  %s2 = inlined_call_operand.vmem [shape: f32[32,1], index: 2, kind: input, shape index: {}]
  %s3 = inlined_call_operand.hbm [shape: f32[8,8], index: 3, kind: output, shape index: {0}]
  %s4 = inlined_call_operand.hbm [shape: f32[8,8], index: 4, kind: output, shape index: {1}]
  %5 = xla_tuple %s3, %s4
  %s6 = sld [smem:[#allocation0]]
  $region30: #{tpu_custom_call.1} parent=0
    _
  %s8 = ssub.s32 1, %s6
  %s9 = scalar_select 0, %s8, %s6
  $region1: #{tpu_custom_call.1} parent=0
    #allocation2 [shape = 'u8[4096]{0}', space=vmem, size = 0x1000, scoped, tag = 'output window, operand 0, single buffered']
    #allocation3 [shape = 's32[1]{0}', space=sflag, size = 0x4, scoped, tag = 'scoped memory for tpu_custom_call.1']
    #allocation4 [shape = 'u8[4096]{0}', space=vmem, size = 0x1000, scoped, tag = 'output window, operand 1, single buffered']
    #allocation5 [shape = 's32[1]{0}', space=sflag, size = 0x4, scoped, tag = 'scoped memory for tpu_custom_call.1']
    %10 = vsyncpa [#allocation3], 0
    %11 = vsyncpa [#allocation5], 0
    // Predicated region
    $region2: #{tpu_custom_call.1} parent=1 // pred_check
      _
    $region3: #{tpu_custom_call.1} parent=1 // pred_check_branch
      %13 = sbr.rel (0) target = $region5
    $region4: #{tpu_custom_call.1} parent=1 // pred_region
      _
    $region5: #{tpu_custom_call.1} parent=1 // pred_fallthru
      _
    // Predicated region
    $region6: #{tpu_custom_call.1} parent=1 // pred_check
      _
    $region7: #{tpu_custom_call.1} parent=1 // pred_check_branch
      %15 = sbr.rel (0) target = $region9
    $region8: #{tpu_custom_call.1} parent=1 // pred_region
      _
    $region9: #{tpu_custom_call.1} parent=1 // pred_fallthru
      _
    // Predicated region
    $region10: #{tpu_custom_call.1} parent=1 // pred_check
      _
    $region11: #{tpu_custom_call.1} parent=1 // pred_check_branch
      %17 = sbr.rel (0) target = $region13
    $region12: #{tpu_custom_call.1} parent=1 // pred_region
      _
    $region13: #{tpu_custom_call.1} parent=1 // pred_fallthru
      _
    %v18 = vld [vmem:[%s2] sm:$0xff]
    %v19 = vld [vmem:[%s2 + $0x8] sm:$0xff]
    %v20 = vld [vmem:[%s2 + $0x10] sm:$0xff]
    %v21 = vld [vmem:[%s2 + $0x18] sm:$0xff]
    %v22 = vld [vmem:[%s0] sm:$0xff]
    %v23 = vld [vmem:[%s0 + $0x8] sm:$0xff]
    %v24 = vld [vmem:[%s0 + $0x10] sm:$0xff]
    %v25 = vld [vmem:[%s0 + $0x18] sm:$0xff]
    %v26 = vld [vmem:[%s0 + $0x20] sm:$0xff]
    %v27 = vld [vmem:[%s0 + $0x28] sm:$0xff]
    %v28 = vld [vmem:[%s0 + $0x30] sm:$0xff]
    %v29 = vld [vmem:[%s0 + $0x38] sm:$0xff]
    %v30 = vld [vmem:[%s0 + $0x40] sm:$0xff]
    %v31 = vld [vmem:[%s0 + $0x48] sm:$0xff]
    %v32 = vld [vmem:[%s0 + $0x50] sm:$0xff]
    %v33 = vld [vmem:[%s0 + $0x58] sm:$0xff]
    %v34 = vld [vmem:[%s0 + $0x60] sm:$0xff]
    %v35 = vld [vmem:[%s0 + $0x68] sm:$0xff]
    %v36 = vld [vmem:[%s0 + $0x70] sm:$0xff]
    %v37 = vld [vmem:[%s0 + $0x78] sm:$0xff]
    %v38 = vld [vmem:[%s0 + $0x80] sm:$0xff]
    %v39 = vld [vmem:[%s0 + $0x88] sm:$0xff]
    %v40 = vld [vmem:[%s0 + $0x90] sm:$0xff]
    %v41 = vld [vmem:[%s0 + $0x98] sm:$0xff]
    %v42 = vld [vmem:[%s0 + $0xa0] sm:$0xff]
    %v43 = vld [vmem:[%s0 + $0xa8] sm:$0xff]
    %v44 = vld [vmem:[%s0 + $0xb0] sm:$0xff]
    %v45 = vld [vmem:[%s0 + $0xb8] sm:$0xff]
    %v46 = vld [vmem:[%s0 + $0xc0] sm:$0xff]
    %v47 = vld [vmem:[%s0 + $0xc8] sm:$0xff]
    %v48 = vld [vmem:[%s0 + $0xd0] sm:$0xff]
    %v49 = vld [vmem:[%s0 + $0xd8] sm:$0xff]
    %v50 = vld [vmem:[%s0 + $0xe0] sm:$0xff]
    %v51 = vld [vmem:[%s0 + $0xe8] sm:$0xff]
    %v52 = vld [vmem:[%s0 + $0xf0] sm:$0xff]
    %v53 = vld [vmem:[%s0 + $0xf8] sm:$0xff]
    %vm54 = vcmask 64512
    %v55 = vsel %vm54, %v22, -inf
    %v56 = vsel %vm54, %v23, -inf
    %v57 = vmax.f32 %v55, %v56
    %v58 = vsel %vm54, %v24, -inf
    %v59 = vmax.f32 %v57, %v58
    %v60 = vsel %vm54, %v25, -inf
    %v61 = vmax.f32 %v59, %v60
    %v62 = vrot.slane %v61, 4
    %v63 = vmax.f32 %v61, %v62
    %v64 = vrot.slane %v63, 2
    %v65 = vmax.f32 %v63, %v64
    %v66 = vrot.slane %v65, 1
    %v67 = vmax.f32 %v65, %v66
    %v68 = vsel %vm54, %v26, -inf
    %v69 = vsel %vm54, %v27, -inf
    %v70 = vmax.f32 %v68, %v69
    %v71 = vsel %vm54, %v28, -inf
    %v72 = vmax.f32 %v70, %v71
    %v73 = vsel %vm54, %v29, -inf
    %v74 = vmax.f32 %v72, %v73
    %v75 = vrot.slane %v74, 4
    %v76 = vmax.f32 %v74, %v75
    %v77 = vrot.slane %v76, 2
    %v78 = vmax.f32 %v76, %v77
    %v79 = vrot.slane %v78, 1
    %v80 = vmax.f32 %v78, %v79
    %v81 = vsel %vm54, %v30, -inf
    %v82 = vsel %vm54, %v31, -inf
    %v83 = vmax.f32 %v81, %v82
    %v84 = vsel %vm54, %v32, -inf
    %v85 = vmax.f32 %v83, %v84
    %v86 = vsel %vm54, %v33, -inf
    %v87 = vmax.f32 %v85, %v86
    %v88 = vrot.slane %v87, 4
    %v89 = vmax.f32 %v87, %v88
    %v90 = vrot.slane %v89, 2
    %v91 = vmax.f32 %v89, %v90
    %v92 = vrot.slane %v91, 1
    %v93 = vmax.f32 %v91, %v92
    %v94 = vsel %vm54, %v34, -inf
    %v95 = vsel %vm54, %v35, -inf
    %v96 = vmax.f32 %v94, %v95
    %v97 = vsel %vm54, %v36, -inf
    %v98 = vmax.f32 %v96, %v97
    %v99 = vsel %vm54, %v37, -inf
    %v100 = vmax.f32 %v98, %v99
    %v101 = vrot.slane %v100, 4
    %v102 = vmax.f32 %v100, %v101
    %v103 = vrot.slane %v102, 2
    %v104 = vmax.f32 %v102, %v103
    %v105 = vrot.slane %v104, 1
    %v106 = vmax.f32 %v104, %v105
    %v107 = vsel %vm54, %v38, -inf
    %v108 = vsel %vm54, %v39, -inf
    %v109 = vmax.f32 %v107, %v108
    %v110 = vsel %vm54, %v40, -inf
    %v111 = vmax.f32 %v109, %v110
    %v112 = vsel %vm54, %v41, -inf
    %v113 = vmax.f32 %v111, %v112
    %v114 = vrot.slane %v113, 4
    %v115 = vmax.f32 %v113, %v114
    %v116 = vrot.slane %v115, 2
    %v117 = vmax.f32 %v115, %v116
    %v118 = vrot.slane %v117, 1
    %v119 = vmax.f32 %v117, %v118
    %v120 = vsel %vm54, %v42, -inf
    %v121 = vsel %vm54, %v43, -inf
    %v122 = vmax.f32 %v120, %v121
    %v123 = vsel %vm54, %v44, -inf
    %v124 = vmax.f32 %v122, %v123
    %v125 = vsel %vm54, %v45, -inf
    %v126 = vmax.f32 %v124, %v125
    %v127 = vrot.slane %v126, 4
    %v128 = vmax.f32 %v126, %v127
    %v129 = vrot.slane %v128, 2
    %v130 = vmax.f32 %v128, %v129
    %v131 = vrot.slane %v130, 1
    %v132 = vmax.f32 %v130, %v131
    %v133 = vsel %vm54, %v46, -inf
    %v134 = vsel %vm54, %v47, -inf
    %v135 = vmax.f32 %v133, %v134
    %v136 = vsel %vm54, %v48, -inf
    %v137 = vmax.f32 %v135, %v136
    %v138 = vsel %vm54, %v49, -inf
    %v139 = vmax.f32 %v137, %v138
    %v140 = vrot.slane %v139, 4
    %v141 = vmax.f32 %v139, %v140
    %v142 = vrot.slane %v141, 2
    %v143 = vmax.f32 %v141, %v142
    %v144 = vrot.slane %v143, 1
    %v145 = vmax.f32 %v143, %v144
    %v146 = vsel %vm54, %v50, -inf
    %v147 = vsel %vm54, %v51, -inf
    %v148 = vmax.f32 %v146, %v147
    %v149 = vsel %vm54, %v52, -inf
    %v150 = vmax.f32 %v148, %v149
    %v151 = vsel %vm54, %v53, -inf
    %v152 = vmax.f32 %v150, %v151
    %v153 = vrot.slane %v152, 4
    %v154 = vmax.f32 %v152, %v153
    %v155 = vrot.slane %v154, 2
    %v156 = vmax.f32 %v154, %v155
    %v157 = vrot.slane %v156, 1
    %v158 = vmax.f32 %v156, %v157
    %v159 = vsub.f32 %v22, %v67
    %v160 = vsub.f32 %v23, %v67
    %v161 = vsub.f32 %v24, %v67
    %v162 = vsub.f32 %v25, %v67
    %v163 = vsub.f32 %v26, %v80
    %v164 = vsub.f32 %v27, %v80
    %v165 = vsub.f32 %v28, %v80
    %v166 = vsub.f32 %v29, %v80
    %v167 = vsub.f32 %v30, %v93
    %v168 = vsub.f32 %v31, %v93
    %v169 = vsub.f32 %v32, %v93
    %v170 = vsub.f32 %v33, %v93
    %v171 = vsub.f32 %v34, %v106
    %v172 = vsub.f32 %v35, %v106
    %v173 = vsub.f32 %v36, %v106
    %v174 = vsub.f32 %v37, %v106
    %v175 = vsub.f32 %v38, %v119
    %v176 = vsub.f32 %v39, %v119
    %v177 = vsub.f32 %v40, %v119
    %v178 = vsub.f32 %v41, %v119
    %v179 = vsub.f32 %v42, %v132
    %v180 = vsub.f32 %v43, %v132
    %v181 = vsub.f32 %v44, %v132
    %v182 = vsub.f32 %v45, %v132
    %v183 = vsub.f32 %v46, %v145
    %v184 = vsub.f32 %v47, %v145
    %v185 = vsub.f32 %v48, %v145
    %v186 = vsub.f32 %v49, %v145
    %v187 = vsub.f32 %v50, %v158
    %v188 = vsub.f32 %v51, %v158
    %v189 = vsub.f32 %v52, %v158
    %v190 = vsub.f32 %v53, %v158
    %v191 = vmul.f32 %v159, 1.442695
    %v192 = vpow.pop %v191
    %v193 = vmul.f32 %v160, 1.442695
    %v194 = vpow.pop %v193
    %v195 = vmul.f32 %v161, 1.442695
    %v196 = vpow.pop %v195
    %v197 = vmul.f32 %v162, 1.442695
    %v198 = vpow.pop %v197
    %v199 = vmul.f32 %v163, 1.442695
    %v200 = vpow.pop %v199
    %v201 = vmul.f32 %v164, 1.442695
    %v202 = vpow.pop %v201
    %v203 = vmul.f32 %v165, 1.442695
    %v204 = vpow.pop %v203
    %v205 = vmul.f32 %v166, 1.442695
    %v206 = vpow.pop %v205
    %v207 = vmul.f32 %v167, 1.442695
    %v208 = vpow.pop %v207
    %v209 = vmul.f32 %v168, 1.442695
    %v210 = vpow.pop %v209
    %v211 = vmul.f32 %v169, 1.442695
    %v212 = vpow.pop %v211
    %v213 = vmul.f32 %v170, 1.442695
    %v214 = vpow.pop %v213
    %v215 = vmul.f32 %v171, 1.442695
    %v216 = vpow.pop %v215
    %v217 = vmul.f32 %v172, 1.442695
    %v218 = vpow.pop %v217
    %v219 = vmul.f32 %v173, 1.442695
    %v220 = vpow.pop %v219
    %v221 = vmul.f32 %v174, 1.442695
    %v222 = vpow.pop %v221
    %v223 = vmul.f32 %v175, 1.442695
    %v224 = vpow.pop %v223
    %v225 = vmul.f32 %v176, 1.442695
    %v226 = vpow.pop %v225
    %v227 = vmul.f32 %v177, 1.442695
    %v228 = vpow.pop %v227
    %v229 = vmul.f32 %v178, 1.442695
    %v230 = vpow.pop %v229
    %v231 = vmul.f32 %v179, 1.442695
    %v232 = vpow.pop %v231
    %v233 = vmul.f32 %v180, 1.442695
    %v234 = vpow.pop %v233
    %v235 = vmul.f32 %v181, 1.442695
    %v236 = vpow.pop %v235
    %v237 = vmul.f32 %v182, 1.442695
    %v238 = vpow.pop %v237
    %v239 = vmul.f32 %v183, 1.442695
    %v240 = vpow.pop %v239
    %v241 = vmul.f32 %v184, 1.442695
    %v242 = vpow.pop %v241
    %v243 = vmul.f32 %v185, 1.442695
    %v244 = vpow.pop %v243
    %v245 = vmul.f32 %v186, 1.442695
    %v246 = vpow.pop %v245
    %v247 = vmul.f32 %v187, 1.442695
    %v248 = vpow.pop %v247
    %v249 = vmul.f32 %v188, 1.442695
    %v250 = vpow.pop %v249
    %v251 = vmul.f32 %v189, 1.442695
    %v252 = vpow.pop %v251
    %v253 = vmul.f32 %v190, 1.442695
    %v254 = vpow.pop %v253
    %v255 = vsel %vm54, %v192, 0.0
    %v256 = vsel %vm54, %v194, 0.0
    %v257 = vadd.f32 %v255, %v256
    %v258 = vsel %vm54, %v196, 0.0
    %v259 = vadd.f32 %v257, %v258
    %v260 = vsel %vm54, %v198, 0.0
    %v261 = vadd.f32 %v259, %v260
    %v262 = vrot.slane %v261, 4
    %v263 = vadd.f32 %v261, %v262
    %v264 = vrot.slane %v263, 2
    %v265 = vadd.f32 %v263, %v264
    %v266 = vrot.slane %v265, 1
    %v267 = vadd.f32 %v265, %v266
    %v268 = vsel %vm54, %v200, 0.0
    %v269 = vsel %vm54, %v202, 0.0
    %v270 = vadd.f32 %v268, %v269
    %v271 = vsel %vm54, %v204, 0.0
    %v272 = vadd.f32 %v270, %v271
    %v273 = vsel %vm54, %v206, 0.0
    %v274 = vadd.f32 %v272, %v273
    %v275 = vrot.slane %v274, 4
    %v276 = vadd.f32 %v274, %v275
    %v277 = vrot.slane %v276, 2
    %v278 = vadd.f32 %v276, %v277
    %v279 = vrot.slane %v278, 1
    %v280 = vadd.f32 %v278, %v279
    %v281 = vsel %vm54, %v208, 0.0
    %v282 = vsel %vm54, %v210, 0.0
    %v283 = vadd.f32 %v281, %v282
    %v284 = vsel %vm54, %v212, 0.0
    %v285 = vadd.f32 %v283, %v284
    %v286 = vsel %vm54, %v214, 0.0
    %v287 = vadd.f32 %v285, %v286
    %v288 = vrot.slane %v287, 4
    %v289 = vadd.f32 %v287, %v288
    %v290 = vrot.slane %v289, 2
    %v291 = vadd.f32 %v289, %v290
    %v292 = vrot.slane %v291, 1
    %v293 = vadd.f32 %v291, %v292
    %v294 = vsel %vm54, %v216, 0.0
    %v295 = vsel %vm54, %v218, 0.0
    %v296 = vadd.f32 %v294, %v295
    %v297 = vsel %vm54, %v220, 0.0
    %v298 = vadd.f32 %v296, %v297
    %v299 = vsel %vm54, %v222, 0.0
    %v300 = vadd.f32 %v298, %v299
    %v301 = vrot.slane %v300, 4
    %v302 = vadd.f32 %v300, %v301
    %v303 = vrot.slane %v302, 2
    %v304 = vadd.f32 %v302, %v303
    %v305 = vrot.slane %v304, 1
    %v306 = vadd.f32 %v304, %v305
    %v307 = vsel %vm54, %v224, 0.0
    %v308 = vsel %vm54, %v226, 0.0
    %v309 = vadd.f32 %v307, %v308
    %v310 = vsel %vm54, %v228, 0.0
    %v311 = vadd.f32 %v309, %v310
    %v312 = vsel %vm54, %v230, 0.0
    %v313 = vadd.f32 %v311, %v312
    %v314 = vrot.slane %v313, 4
    %v315 = vadd.f32 %v313, %v314
    %v316 = vrot.slane %v315, 2
    %v317 = vadd.f32 %v315, %v316
    %v318 = vrot.slane %v317, 1
    %v319 = vadd.f32 %v317, %v318
    %v320 = vsel %vm54, %v232, 0.0
    %v321 = vsel %vm54, %v234, 0.0
    %v322 = vadd.f32 %v320, %v321
    %v323 = vsel %vm54, %v236, 0.0
    %v324 = vadd.f32 %v322, %v323
    %v325 = vsel %vm54, %v238, 0.0
    %v326 = vadd.f32 %v324, %v325
    %v327 = vrot.slane %v326, 4
    %v328 = vadd.f32 %v326, %v327
    %v329 = vrot.slane %v328, 2
    %v330 = vadd.f32 %v328, %v329
    %v331 = vrot.slane %v330, 1
    %v332 = vadd.f32 %v330, %v331
    %v333 = vsel %vm54, %v240, 0.0
    %v334 = vsel %vm54, %v242, 0.0
    %v335 = vadd.f32 %v333, %v334
    %v336 = vsel %vm54, %v244, 0.0
    %v337 = vadd.f32 %v335, %v336
    %v338 = vsel %vm54, %v246, 0.0
    %v339 = vadd.f32 %v337, %v338
    %v340 = vrot.slane %v339, 4
    %v341 = vadd.f32 %v339, %v340
    %v342 = vrot.slane %v341, 2
    %v343 = vadd.f32 %v341, %v342
    %v344 = vrot.slane %v343, 1
    %v345 = vadd.f32 %v343, %v344
    %v346 = vsel %vm54, %v248, 0.0
    %v347 = vsel %vm54, %v250, 0.0
    %v348 = vadd.f32 %v346, %v347
    %v349 = vsel %vm54, %v252, 0.0
    %v350 = vadd.f32 %v348, %v349
    %v351 = vsel %vm54, %v254, 0.0
    %v352 = vadd.f32 %v350, %v351
    %v353 = vrot.slane %v352, 4
    %v354 = vadd.f32 %v352, %v353
    %v355 = vrot.slane %v354, 2
    %v356 = vadd.f32 %v354, %v355
    %v357 = vrot.slane %v356, 1
    %v358 = vadd.f32 %v356, %v357
    %v359 = vlog2.pop %v267
    %v360 = vmul.f32 %v359, 0.6931472
    %v361 = vlog2.pop %v280
    %v362 = vmul.f32 %v361, 0.6931472
    %v363 = vlog2.pop %v293
    %v364 = vmul.f32 %v363, 0.6931472
    %v365 = vlog2.pop %v306
    %v366 = vmul.f32 %v365, 0.6931472
    %v367 = vlog2.pop %v319
    %v368 = vmul.f32 %v367, 0.6931472
    %v369 = vlog2.pop %v332
    %v370 = vmul.f32 %v369, 0.6931472
    %v371 = vlog2.pop %v345
    %v372 = vmul.f32 %v371, 0.6931472
    %v373 = vlog2.pop %v358
    %v374 = vmul.f32 %v373, 0.6931472
    %v375 = vadd.f32 %v67, %v360
    %v376 = vadd.f32 %v80, %v362
    %v377 = vadd.f32 %v93, %v364
    %v378 = vadd.f32 %v106, %v366
    %v379 = vadd.f32 %v119, %v368
    %v380 = vadd.f32 %v132, %v370
    %v381 = vadd.f32 %v145, %v372
    %v382 = vadd.f32 %v158, %v374
    %v383 = vld [vmem:[%s1] sm:$0xff]
    %v384 = vlaneseq
    %v385 = vshrl.u32 %v384, 7
    %v386 = vadd.s32 %v385, 8
    %v387 = vadd.s32 %v385, 16
    %v388 = vadd.s32 %v385, 24
    %v389 = vcombine.high %v383, %v383
    %v391 = vunpack.c.l.s4 1966171168
    %v392 = vunpack.c.0.s8 %v391
    %v393 = vlaneseq
    %v394 = vshrl.u32 %v393, 7
    %v395 = vsub.s32 %v392, %v394
    %v396 = vrot.slane %v383, %v395
    %v398 = vunpack.c.l.s4 1966171168
    %v399 = vunpack.c.0.s8 %v398
    %v400 = vlaneseq
    %v401 = vshrl.u32 %v400, 7
    %v402 = vsub.s32 %v399, %v401
    %v403 = vrot.slane %v389, %v402
    %v404 = vcombine.high %v396, %v396
    %v405 = vcombine.high %v403, %v403
    %v407 = vunpack.c.l.s4 1966171168
    %v408 = vunpack.c.0.s8 %v407
    %v409 = vlaneseq
    %v410 = vshrl.u32 %v409, 7
    %v411 = vsub.s32 %v408, %v410
    %v412 = vrot.slane %v396, %v411
    %v414 = vunpack.c.l.s4 1966171168
    %v415 = vunpack.c.0.s8 %v414
    %v416 = vlaneseq
    %v417 = vshrl.u32 %v416, 7
    %v418 = vsub.s32 %v415, %v417
    %v419 = vrot.slane %v403, %v418
    %v421 = vunpack.c.l.s4 1966171168
    %v422 = vunpack.c.0.s8 %v421
    %v423 = vlaneseq
    %v424 = vshrl.u32 %v423, 7
    %v425 = vsub.s32 %v422, %v424
    %v426 = vrot.slane %v404, %v425
    %v428 = vunpack.c.l.s4 1966171168
    %v429 = vunpack.c.0.s8 %v428
    %v430 = vlaneseq
    %v431 = vshrl.u32 %v430, 7
    %v432 = vsub.s32 %v429, %v431
    %v433 = vrot.slane %v405, %v432
    %v434 = vcombine.high %v412, %v412
    %v435 = vcombine.high %v419, %v419
    %v436 = vcombine.high %v426, %v426
    %v437 = vcombine.high %v433, %v433
    %v438 = vlaneseq
    %v439 = vshrl.u32 %v438, 7
    %v440 = vsub.s32 0, %v439
    %v441 = vrot.slane %v412, %v440
    %v442 = vlaneseq
    %v443 = vshrl.u32 %v442, 7
    %v444 = vsub.s32 0, %v443
    %v445 = vrot.slane %v426, %v444
    %v446 = vlaneseq
    %v447 = vshrl.u32 %v446, 7
    %v448 = vsub.s32 0, %v447
    %v449 = vrot.slane %v434, %v448
    %v450 = vlaneseq
    %v451 = vshrl.u32 %v450, 7
    %v452 = vsub.s32 0, %v451
    %v453 = vrot.slane %v436, %v452
    %v454 = vlaneseq
    %v455 = vshrl.u32 %v454, 7
    %v456 = vsub.s32 0, %v455
    %v457 = vrot.slane %v419, %v456
    %v458 = vlaneseq
    %v459 = vshrl.u32 %v458, 7
    %v460 = vsub.s32 0, %v459
    %v461 = vrot.slane %v433, %v460
    %v462 = vlaneseq
    %v463 = vshrl.u32 %v462, 7
    %v464 = vsub.s32 0, %v463
    %v465 = vrot.slane %v435, %v464
    %v466 = vlaneseq
    %v467 = vshrl.u32 %v466, 7
    %v468 = vsub.s32 0, %v467
    %v469 = vrot.slane %v437, %v468
    %vm470 = vcmp.eq.s32.totalorder %v385, %v441
    %vm471 = vcmp.eq.s32.totalorder %v386, %v441
    %vm472 = vcmp.eq.s32.totalorder %v387, %v441
    %vm473 = vcmp.eq.s32.totalorder %v388, %v441
    %vm474 = vcmp.eq.s32.totalorder %v385, %v445
    %vm475 = vcmp.eq.s32.totalorder %v386, %v445
    %vm476 = vcmp.eq.s32.totalorder %v387, %v445
    %vm477 = vcmp.eq.s32.totalorder %v388, %v445
    %vm478 = vcmp.eq.s32.totalorder %v385, %v449
    %vm479 = vcmp.eq.s32.totalorder %v386, %v449
    %vm480 = vcmp.eq.s32.totalorder %v387, %v449
    %vm481 = vcmp.eq.s32.totalorder %v388, %v449
    %vm482 = vcmp.eq.s32.totalorder %v385, %v453
    %vm483 = vcmp.eq.s32.totalorder %v386, %v453
    %vm484 = vcmp.eq.s32.totalorder %v387, %v453
    %vm485 = vcmp.eq.s32.totalorder %v388, %v453
    %vm486 = vcmp.eq.s32.totalorder %v385, %v457
    %vm487 = vcmp.eq.s32.totalorder %v386, %v457
    %vm488 = vcmp.eq.s32.totalorder %v387, %v457
    %vm489 = vcmp.eq.s32.totalorder %v388, %v457
    %vm490 = vcmp.eq.s32.totalorder %v385, %v461
    %vm491 = vcmp.eq.s32.totalorder %v386, %v461
    %vm492 = vcmp.eq.s32.totalorder %v387, %v461
    %vm493 = vcmp.eq.s32.totalorder %v388, %v461
    %vm494 = vcmp.eq.s32.totalorder %v385, %v465
    %vm495 = vcmp.eq.s32.totalorder %v386, %v465
    %vm496 = vcmp.eq.s32.totalorder %v387, %v465
    %vm497 = vcmp.eq.s32.totalorder %v388, %v465
    %vm498 = vcmp.eq.s32.totalorder %v385, %v469
    %vm499 = vcmp.eq.s32.totalorder %v386, %v469
    %vm500 = vcmp.eq.s32.totalorder %v387, %v469
    %vm501 = vcmp.eq.s32.totalorder %v388, %v469
    %v502 = vsel %vm470, 0.9032258, 0.0032258064
    %v503 = vsel %vm471, 0.9032258, 0.0032258064
    %v504 = vsel %vm472, 0.9032258, 0.0032258064
    %v505 = vsel %vm473, 0.9032258, 0.0032258064
    %v506 = vsel %vm474, 0.9032258, 0.0032258064
    %v507 = vsel %vm475, 0.9032258, 0.0032258064
    %v508 = vsel %vm476, 0.9032258, 0.0032258064
    %v509 = vsel %vm477, 0.9032258, 0.0032258064
    %v510 = vsel %vm478, 0.9032258, 0.0032258064
    %v511 = vsel %vm479, 0.9032258, 0.0032258064
    %v512 = vsel %vm480, 0.9032258, 0.0032258064
    %v513 = vsel %vm481, 0.9032258, 0.0032258064
    %v514 = vsel %vm482, 0.9032258, 0.0032258064
    %v515 = vsel %vm483, 0.9032258, 0.0032258064
    %v516 = vsel %vm484, 0.9032258, 0.0032258064
    %v517 = vsel %vm485, 0.9032258, 0.0032258064
    %v518 = vsel %vm486, 0.9032258, 0.0032258064
    %v519 = vsel %vm487, 0.9032258, 0.0032258064
    %v520 = vsel %vm488, 0.9032258, 0.0032258064
    %v521 = vsel %vm489, 0.9032258, 0.0032258064
    %v522 = vsel %vm490, 0.9032258, 0.0032258064
    %v523 = vsel %vm491, 0.9032258, 0.0032258064
    %v524 = vsel %vm492, 0.9032258, 0.0032258064
    %v525 = vsel %vm493, 0.9032258, 0.0032258064
    %v526 = vsel %vm494, 0.9032258, 0.0032258064
    %v527 = vsel %vm495, 0.9032258, 0.0032258064
    %v528 = vsel %vm496, 0.9032258, 0.0032258064
    %v529 = vsel %vm497, 0.9032258, 0.0032258064
    %v530 = vsel %vm498, 0.9032258, 0.0032258064
    %v531 = vsel %vm499, 0.9032258, 0.0032258064
    %v532 = vsel %vm500, 0.9032258, 0.0032258064
    %v533 = vsel %vm501, 0.9032258, 0.0032258064
    %v534 = vsub.f32 %v375, %v22
    %v535 = vsub.f32 %v375, %v23
    %v536 = vsub.f32 %v375, %v24
    %v537 = vsub.f32 %v375, %v25
    %v538 = vsub.f32 %v376, %v26
    %v539 = vsub.f32 %v376, %v27
    %v540 = vsub.f32 %v376, %v28
    %v541 = vsub.f32 %v376, %v29
    %v542 = vsub.f32 %v377, %v30
    %v543 = vsub.f32 %v377, %v31
    %v544 = vsub.f32 %v377, %v32
    %v545 = vsub.f32 %v377, %v33
    %v546 = vsub.f32 %v378, %v34
    %v547 = vsub.f32 %v378, %v35
    %v548 = vsub.f32 %v378, %v36
    %v549 = vsub.f32 %v378, %v37
    %v550 = vsub.f32 %v379, %v38
    %v551 = vsub.f32 %v379, %v39
    %v552 = vsub.f32 %v379, %v40
    %v553 = vsub.f32 %v379, %v41
    %v554 = vsub.f32 %v380, %v42
    %v555 = vsub.f32 %v380, %v43
    %v556 = vsub.f32 %v380, %v44
    %v557 = vsub.f32 %v380, %v45
    %v558 = vsub.f32 %v381, %v46
    %v559 = vsub.f32 %v381, %v47
    %v560 = vsub.f32 %v381, %v48
    %v561 = vsub.f32 %v381, %v49
    %v562 = vsub.f32 %v382, %v50
    %v563 = vsub.f32 %v382, %v51
    %v564 = vsub.f32 %v382, %v52
    %v565 = vsub.f32 %v382, %v53
    %567 = vset.pattern.permute.xlu0 0
    %568 = vperm.xlu0 %567, %v18
    %v569 = vpop.permute.xlu0 %568
    %572 = vset.pattern.permute.xlu0 0
    %573 = vperm.xlu0 %572, %v19
    %v574 = vpop.permute.xlu0 %573
    %577 = vset.pattern.permute.xlu0 0
    %578 = vperm.xlu0 %577, %v20
    %v579 = vpop.permute.xlu0 %578
    %582 = vset.pattern.permute.xlu0 0
    %583 = vperm.xlu0 %582, %v21
    %v584 = vpop.permute.xlu0 %583
    %v586 = vmul.f32 %v534, %v569
    %v587 = vmul.f32 %v535, %v574
    %v588 = vmul.f32 %v536, %v579
    %v589 = vmul.f32 %v537, %v584
    %v590 = vmul.f32 %v538, %v569
    %v591 = vmul.f32 %v539, %v574
    %v592 = vmul.f32 %v540, %v579
    %v593 = vmul.f32 %v541, %v584
    %v594 = vmul.f32 %v542, %v569
    %v595 = vmul.f32 %v543, %v574
    %v596 = vmul.f32 %v544, %v579
    %v597 = vmul.f32 %v545, %v584
    %v598 = vmul.f32 %v546, %v569
    %v599 = vmul.f32 %v547, %v574
    %v600 = vmul.f32 %v548, %v579
    %v601 = vmul.f32 %v549, %v584
    %v602 = vmul.f32 %v550, %v569
    %v603 = vmul.f32 %v551, %v574
    %v604 = vmul.f32 %v552, %v579
    %v605 = vmul.f32 %v553, %v584
    %v606 = vmul.f32 %v554, %v569
    %v607 = vmul.f32 %v555, %v574
    %v608 = vmul.f32 %v556, %v579
    %v609 = vmul.f32 %v557, %v584
    %v610 = vmul.f32 %v558, %v569
    %v611 = vmul.f32 %v559, %v574
    %v612 = vmul.f32 %v560, %v579
    %v613 = vmul.f32 %v561, %v584
    %v614 = vmul.f32 %v562, %v569
    %v615 = vmul.f32 %v563, %v574
    %v616 = vmul.f32 %v564, %v579
    %v617 = vmul.f32 %v565, %v584
    %v618 = vmul.f32 %v586, %v502
    %v619 = vmul.f32 %v587, %v503
    %v620 = vmul.f32 %v588, %v504
    %v621 = vmul.f32 %v589, %v505
    %v622 = vmul.f32 %v590, %v506
    %v623 = vmul.f32 %v591, %v507
    %v624 = vmul.f32 %v592, %v508
    %v625 = vmul.f32 %v593, %v509
    %v626 = vmul.f32 %v594, %v510
    %v627 = vmul.f32 %v595, %v511
    %v628 = vmul.f32 %v596, %v512
    %v629 = vmul.f32 %v597, %v513
    %v630 = vmul.f32 %v598, %v514
    %v631 = vmul.f32 %v599, %v515
    %v632 = vmul.f32 %v600, %v516
    %v633 = vmul.f32 %v601, %v517
    %v634 = vmul.f32 %v602, %v518
    %v635 = vmul.f32 %v603, %v519
    %v636 = vmul.f32 %v604, %v520
    %v637 = vmul.f32 %v605, %v521
    %v638 = vmul.f32 %v606, %v522
    %v639 = vmul.f32 %v607, %v523
    %v640 = vmul.f32 %v608, %v524
    %v641 = vmul.f32 %v609, %v525
    %v642 = vmul.f32 %v610, %v526
    %v643 = vmul.f32 %v611, %v527
    %v644 = vmul.f32 %v612, %v528
    %v645 = vmul.f32 %v613, %v529
    %v646 = vmul.f32 %v614, %v530
    %v647 = vmul.f32 %v615, %v531
    %v648 = vmul.f32 %v616, %v532
    %v649 = vmul.f32 %v617, %v533
    %v650 = vsel %vm54, %v618, 0.0
    %v651 = vsel %vm54, %v619, 0.0
    %v652 = vadd.f32 %v650, %v651
    %v653 = vsel %vm54, %v620, 0.0
    %v654 = vadd.f32 %v652, %v653
    %v655 = vsel %vm54, %v621, 0.0
    %v656 = vadd.f32 %v654, %v655
    %v657 = vrot.slane %v656, 4
    %v658 = vadd.f32 %v656, %v657
    %v659 = vrot.slane %v658, 2
    %v660 = vadd.f32 %v658, %v659
    %v661 = vrot.slane %v660, 1
    %v662 = vadd.f32 %v660, %v661
    %v663 = vsel %vm54, %v622, 0.0
    %v664 = vsel %vm54, %v623, 0.0
    %v665 = vadd.f32 %v663, %v664
    %v666 = vsel %vm54, %v624, 0.0
    %v667 = vadd.f32 %v665, %v666
    %v668 = vsel %vm54, %v625, 0.0
    %v669 = vadd.f32 %v667, %v668
    %v670 = vrot.slane %v669, 4
    %v671 = vadd.f32 %v669, %v670
    %v672 = vrot.slane %v671, 2
    %v673 = vadd.f32 %v671, %v672
    %v674 = vrot.slane %v673, 1
    %v675 = vadd.f32 %v673, %v674
    %v676 = vsel %vm54, %v626, 0.0
    %v677 = vsel %vm54, %v627, 0.0
    %v678 = vadd.f32 %v676, %v677
    %v679 = vsel %vm54, %v628, 0.0
    %v680 = vadd.f32 %v678, %v679
    %v681 = vsel %vm54, %v629, 0.0
    %v682 = vadd.f32 %v680, %v681
    %v683 = vrot.slane %v682, 4
    %v684 = vadd.f32 %v682, %v683
    %v685 = vrot.slane %v684, 2
    %v686 = vadd.f32 %v684, %v685
    %v687 = vrot.slane %v686, 1
    %v688 = vadd.f32 %v686, %v687
    %v689 = vsel %vm54, %v630, 0.0
    %v690 = vsel %vm54, %v631, 0.0
    %v691 = vadd.f32 %v689, %v690
    %v692 = vsel %vm54, %v632, 0.0
    %v693 = vadd.f32 %v691, %v692
    %v694 = vsel %vm54, %v633, 0.0
    %v695 = vadd.f32 %v693, %v694
    %v696 = vrot.slane %v695, 4
    %v697 = vadd.f32 %v695, %v696
    %v698 = vrot.slane %v697, 2
    %v699 = vadd.f32 %v697, %v698
    %v700 = vrot.slane %v699, 1
    %v701 = vadd.f32 %v699, %v700
    %v702 = vsel %vm54, %v634, 0.0
    %v703 = vsel %vm54, %v635, 0.0
    %v704 = vadd.f32 %v702, %v703
    %v705 = vsel %vm54, %v636, 0.0
    %v706 = vadd.f32 %v704, %v705
    %v707 = vsel %vm54, %v637, 0.0
    %v708 = vadd.f32 %v706, %v707
    %v709 = vrot.slane %v708, 4
    %v710 = vadd.f32 %v708, %v709
    %v711 = vrot.slane %v710, 2
    %v712 = vadd.f32 %v710, %v711
    %v713 = vrot.slane %v712, 1
    %v714 = vadd.f32 %v712, %v713
    %v715 = vsel %vm54, %v638, 0.0
    %v716 = vsel %vm54, %v639, 0.0
    %v717 = vadd.f32 %v715, %v716
    %v718 = vsel %vm54, %v640, 0.0
    %v719 = vadd.f32 %v717, %v718
    %v720 = vsel %vm54, %v641, 0.0
    %v721 = vadd.f32 %v719, %v720
    %v722 = vrot.slane %v721, 4
    %v723 = vadd.f32 %v721, %v722
    %v724 = vrot.slane %v723, 2
    %v725 = vadd.f32 %v723, %v724
    %v726 = vrot.slane %v725, 1
    %v727 = vadd.f32 %v725, %v726
    %v728 = vsel %vm54, %v642, 0.0
    %v729 = vsel %vm54, %v643, 0.0
    %v730 = vadd.f32 %v728, %v729
    %v731 = vsel %vm54, %v644, 0.0
    %v732 = vadd.f32 %v730, %v731
    %v733 = vsel %vm54, %v645, 0.0
    %v734 = vadd.f32 %v732, %v733
    %v735 = vrot.slane %v734, 4
    %v736 = vadd.f32 %v734, %v735
    %v737 = vrot.slane %v736, 2
    %v738 = vadd.f32 %v736, %v737
    %v739 = vrot.slane %v738, 1
    %v740 = vadd.f32 %v738, %v739
    %v741 = vsel %vm54, %v646, 0.0
    %v742 = vsel %vm54, %v647, 0.0
    %v743 = vadd.f32 %v741, %v742
    %v744 = vsel %vm54, %v648, 0.0
    %v745 = vadd.f32 %v743, %v744
    %v746 = vsel %vm54, %v649, 0.0
    %v747 = vadd.f32 %v745, %v746
    %v748 = vrot.slane %v747, 4
    %v749 = vadd.f32 %v747, %v748
    %v750 = vrot.slane %v749, 2
    %v751 = vadd.f32 %v749, %v750
    %v752 = vrot.slane %v751, 1
    %v753 = vadd.f32 %v751, %v752
    %vm754 = vcmp.ne.s32.totalorder %v383, 0
    %v755 = vsel %vm754, 1, 0
    %v756 = vcvt.s32.f32 %v755
    %v758 = vrot.slane %v756, 1
    %v759 = vrot.slane %v756, 2
    %v760 = vrot.slane %v756, 3
    %v761 = vrot.slane %v756, 4
    %v762 = vrot.slane %v756, 5
    %v763 = vrot.slane %v756, 6
    %v764 = vrot.slane %v756, 7
    %v773 = vmul.f32 %v662, %v756
    %v774 = vmul.f32 %v675, %v758
    %v775 = vmul.f32 %v688, %v759
    %v776 = vmul.f32 %v701, %v760
    %v777 = vmul.f32 %v714, %v761
    %v778 = vmul.f32 %v727, %v762
    %v779 = vmul.f32 %v740, %v763
    %v780 = vmul.f32 %v753, %v764
    %v789 = vrot.slane %v774, 7
    %vm790 = vcmask 1041409
    %v791 = vsel %vm790, %v789, %v773
    %v792 = vrot.slane %v775, 6
    %vm793 = vcmask 1042434
    %v794 = vsel %vm793, %v792, %v791
    %v795 = vrot.slane %v776, 5
    %vm796 = vcmask 1043459
    %v797 = vsel %vm796, %v795, %v794
    %v798 = vrot.slane %v777, 4
    %vm799 = vcmask 1044484
    %v800 = vsel %vm799, %v798, %v797
    %v801 = vrot.slane %v778, 3
    %vm802 = vcmask 1045509
    %v803 = vsel %vm802, %v801, %v800
    %v804 = vrot.slane %v779, 2
    %vm805 = vcmask 1046534
    %v806 = vsel %vm805, %v804, %v803
    %v807 = vrot.slane %v780, 1
    %vm808 = vcmask 1047559
    %v809 = vsel %vm808, %v807, %v806
    %811 = vst.msk [vmem:[#allocation2] sm:$0xff] %vm54, %v809
    %812 = vst.msk [vmem:[#allocation4] sm:$0xff] %vm54, %v756
    // Predicated region
    $region14: #{tpu_custom_call.1} parent=1 // pred_check
      _
    $region15: #{tpu_custom_call.1} parent=1 // pred_check_branch
      %814 = sbr.rel (0) target = $region17
    $region16: #{tpu_custom_call.1} parent=1 // pred_region
      %s816 = ssub.s32 128, 128
      %817 = vsyncadd [#allocation3], %s816
      %s819 = sshll.u32 [#allocation2], 4
      %s820 = int_to_ptr.vmem [resolvable:$true] %s819
      %822 = dma.vmem_to_hbm [thread:$0]  %s820, 128, %s3, [#allocation3]
    $region17: #{tpu_custom_call.1} parent=1 // pred_fallthru
      _
    // Predicated region
    $region18: #{tpu_custom_call.1} parent=1 // pred_check
      _
    $region19: #{tpu_custom_call.1} parent=1 // pred_check_branch
      %824 = sbr.rel (0) target = $region21
    $region20: #{tpu_custom_call.1} parent=1 // pred_region
      %s826 = ssub.s32 128, 128
      %827 = vsyncadd [#allocation5], %s826
      %s829 = sshll.u32 [#allocation4], 4
      %s830 = int_to_ptr.vmem [resolvable:$true] %s829
      %832 = dma.vmem_to_hbm [thread:$0]  %s830, 128, %s4, [#allocation5]
    $region21: #{tpu_custom_call.1} parent=1 // pred_fallthru
      _
    // Predicated region
    $region22: #{tpu_custom_call.1} parent=1 // pred_check
      _
    $region23: #{tpu_custom_call.1} parent=1 // pred_check_branch
      %834 = sbr.rel (0) target = $region25
    $region24: #{tpu_custom_call.1} parent=1 // pred_region
      %835 = dma.done [#allocation3], 128
    $region25: #{tpu_custom_call.1} parent=1 // pred_fallthru
      _
    // Predicated region
    $region26: #{tpu_custom_call.1} parent=1 // pred_check
      _
    $region27: #{tpu_custom_call.1} parent=1 // pred_check_branch
      %837 = sbr.rel (0) target = $region29
    $region28: #{tpu_custom_call.1} parent=1 // pred_region
      %838 = dma.done [#allocation5], 128
    $region29: #{tpu_custom_call.1} parent=1 // pred_fallthru
      _
    %839 = vsyncpa [#allocation3], 1
    %840 = vsyncpa [#allocation5], 1

</llo_original>
